<compile_context>
chip_gen: v7x
topology: tpu7x:2x2x1
jax: 0.10.0
libtpu: 0.0.40
codegen_flags: <defaults>
</compile_context>

<pallas_src>
import jax
import jax.numpy as jnp
from jax.experimental import pallas as pl
from jax.experimental.pallas import tpu as pltpu

_MiB = 1024 * 1024


def _round_up(x, m):
    return (x + m - 1) // m * m


def _vmem_limit_bytes():
    """Hardware-derived VMEM budget (v5e/v6e: 128 MiB phys -> 100 MiB; v7x: 64 MiB -> 48 MiB)."""
    try:
        phys = int(getattr(pltpu.get_tpu_info(), "vmem_capacity_bytes"))
    except Exception:
        phys = 64 * _MiB                      # conservative fallback (v7x per-TC physical)
    return int(min(100 * _MiB, max(32 * _MiB, phys - 16 * _MiB)))


def _conv_tiles(cout_pad, K, M):
    """Pick (tk, K_pad, tm, M_pad): pad up to tiles (never shrink), budget tm from VMEM."""
    # MXU contraction granularity: 256-multiples on v6e/v7x, 512 = 4x128 also ideal on v5e.
    tk = min(512, _round_up(K, 256))
    K_pad = _round_up(K, tk)

    # Footprint: double-buffered A (bf16) + resident W (bf16, x2 buffers) + resident f32 output.
    budget = int(_vmem_limit_bytes() * 0.6)
    w_bytes = 2 * cout_pad * K_pad * 2
    per_tm = 2 * tk * 2 + 2 * cout_pad * 4
    tm_budget = max(128, ((budget - w_bytes) // per_tm) // 128 * 128)
    tm = max(128, min(4096, tm_budget, _round_up(M, 128)))
    M_pad = _round_up(M, tm)

    # v7x has 2 TensorCores: keep at least 2 "parallel" M tiles whenever M allows it.
    if M_pad // tm < 2 and tm >= 256:
        tm //= 2
        M_pad = _round_up(M, tm)
    return tk, K_pad, tm, M_pad


# ----------------------------- Pallas kernels ------------------------------

def _sumsq_rows_kernel(x_ref, o_ref):
    """Per-row sum of squares, accumulated across lane-axis grid steps.

    x_ref: [B*C, bs_tile] f32 (rows on sublanes, spatial lane-dense).
    o_ref: [B*C, 1] f32, constant index_map -> resident accumulator across the grid.
    """
    @pl.when(pl.program_id(0) == 0)
    def _init():
        o_ref[...] = jnp.zeros_like(o_ref)

    x = x_ref[...]
    o_ref[...] += jnp.sum(x * x, axis=1, keepdims=True)


def _conv_matmul_kernel(w_ref, a_ref, o_ref):
    """Lane-dense conv matmul: o[Cout_pad, tm] += W[:, k0:k0+tk] @ A[tk, tm].

    w_ref: whole [Cout_pad, K_pad] bf16, VMEM-resident (constant index_map); sliced with pl.ds.
    o_ref: [Cout_pad, tm] f32, resident across the trailing K axis -> direct accumulation.
    """
    kk = pl.program_id(1)

    @pl.when(kk == 0)
    def _init():
        o_ref[...] = jnp.zeros_like(o_ref)

    tk = a_ref.shape[0]
    k0 = pl.multiple_of(kk * tk, tk)
    o_ref[...] += jnp.dot(w_ref[:, pl.ds(k0, tk)], a_ref[...],
                          preferred_element_type=jnp.float32)


# ------------------------------- wrappers -----------------------------------

def channel_sumsq(x):
    """x: [B, C, D, H, W] -> per-channel sum_{batch,spatial} x^2, shape [C] f32."""
    B, C = x.shape[0], x.shape[1]
    S = 1
    for d in x.shape[2:]:
        S *= d
    rows = B * C

    xf = x.reshape(rows, S).astype(jnp.float32)        # contiguous view, no transpose pass

    bs_tile = min(8192, _round_up(S, 128))              # big lane tile; block is rows*tile*4 B
    S_pad = _round_up(S, bs_tile)
    if S_pad != S:
        xf = jnp.pad(xf, ((0, 0), (0, S_pad - S)))      # zero pad: no effect on sum(x^2)

    out = pl.pallas_call(
        _sumsq_rows_kernel,
        out_shape=jax.ShapeDtypeStruct((rows, 1), jnp.float32),
        grid=(S_pad // bs_tile,),
        in_specs=[pl.BlockSpec((rows, bs_tile), lambda i: (0, i))],
        out_specs=pl.BlockSpec((rows, 1), lambda i: (0, 0)),     # resident accumulator
        compiler_params=pltpu.CompilerParams(
            dimension_semantics=("arbitrary",),
            vmem_limit_bytes=_vmem_limit_bytes()),
    )(xf)
    # tiny epilogue: per-(b, c) row sums -> per-channel sums
    return out[:, 0].reshape(B, C).sum(axis=0)


def conv3d_valid_lane_dense(x, w):
    """Valid 3-D conv (stride 1, padding 0): out[Cout, M] = W[Cout, K] @ A[K, M], lane-dense M.

    x: [B, Cin, D, H, W] ; w: [Cout, Cin, k, k, k] -> [B, Cout, Do, Ho, Wo]  (f32)
    """
    B, Cin, D, H, W = x.shape
    Cout, _, k, _, _ = w.shape
    Do, Ho, Wo = D - k + 1, H - k + 1, W - k + 1
    M = B * Do * Ho * Wo
    K = Cin * k ** 3
    cout_pad = _round_up(Cout, 8)                       # full sublane group

    tk, K_pad, tm, M_pad = _conv_tiles(cout_pad, K, M)

    # --- wrapper im2col in bf16 (interim; see TODO about fusing the tap loop into the grid) ---
    x_t = x.astype(jnp.bfloat16).transpose(1, 0, 2, 3, 4)          # [Cin, B, D, H, W] bf16
    slices = []
    for kd in range(k):
        for kh in range(k):
            for kw in range(k):
                slices.append(x_t[:, :, kd:kd + Do, kh:kh + Ho, kw:kw + Wo])
    patches = jnp.stack(slices, axis=1)                             # [Cin, k^3, B, Do, Ho, Wo]
    a_t = patches.reshape(K, M)                                     # rows ordered (c, kd, kh, kw)
    a_t = jnp.pad(a_t, ((0, K_pad - K), (0, M_pad - M)))            # zero rows/cols: exact

    w_mat = jnp.pad(w.reshape(Cout, K).astype(jnp.float32),
                    ((0, cout_pad - Cout), (0, K_pad - K))).astype(jnp.bfloat16)

    out = pl.pallas_call(
        _conv_matmul_kernel,
        out_shape=jax.ShapeDtypeStruct((cout_pad, M_pad), jnp.float32),
        grid=(M_pad // tm, K_pad // tk),                            # reduction (K) axis last
        in_specs=[pl.BlockSpec((cout_pad, K_pad), lambda i, kk: (0, 0)),   # W resident, one DMA
                  pl.BlockSpec((tk, tm), lambda i, kk: (kk, i))],          # A: pipelined stream
        out_specs=pl.BlockSpec((cout_pad, tm), lambda i, kk: (0, i)),      # f32, K-resident
        compiler_params=pltpu.CompilerParams(
            dimension_semantics=("parallel", "arbitrary"),          # M tiles shard across TCs
            vmem_limit_bytes=_vmem_limit_bytes()),
    )(w_mat, a_t)

    out = out[:Cout, :M].reshape(Cout, B, Do, Ho, Wo)
    return out.transpose(1, 0, 2, 3, 4)                             # [B, Cout, Do, Ho, Wo]


def joint_convolution(x, repr_in, bn_weight, conv_weight, eps=1e-5):
    """JointConvolution.forward: y = SE3BatchNorm(x); return SE3Convolution(y).

    Implemented as: per-channel batch statistics (Pallas reduction) -> fold the BN scale into
    the conv weights (exact: BN is a pure per-channel scale, no bias/mean) -> Pallas conv GEMM.
    """
    B = x.shape[0]
    S = x.shape[2] * x.shape[3] * x.shape[4]
    bn_repr = [(m, 2 * j + 1) for m, j in repr_in]

    sumsq = channel_sumsq(x)                                        # [C]  (Pallas reduction)

    denom = jnp.float32(B * S)
    scale = []
    ix, iw = 0, 0
    for m, d in bn_repr:
        for _ in range(m):
            field_var = jnp.sum(sumsq[ix:ix + d]) / denom           # E_{b,s}[ sum_d x_d^2 ]
            s = bn_weight[iw] * jax.lax.rsqrt(field_var + eps)
            scale.append(jnp.broadcast_to(s, (d,)))
            ix += d
            iw += 1
    scale = jnp.concatenate(scale).astype(jnp.float32)              # [C_in] per-channel scale

    # conv(x * scale_c, W) == conv(x, W * scale_c): tiny weight-side op, no activation pass.
    w_folded = conv_weight.astype(jnp.float32) * scale[None, :, None, None, None]

    return conv3d_valid_lane_dense(x, w_folded)


# --------------------------------- main --------------------------------------

if __name__ == "__main__":
    # repr = tuple of (multiplicity, rotation order j); channels = sum(m * (2j+1))
    repr_in = ((2, 0), (1, 1))    # -> C_in  = 2*1 + 1*3 = 5
    repr_out = ((2, 0), (1, 1))   # -> C_out = 5
    size = 5
    B, D, H, W = 2, 8, 8, 8

    c_in = sum(m * (2 * j + 1) for m, j in repr_in)
    c_out = sum(m * (2 * j + 1) for m, j in repr_out)
    n_fields_in = sum(m for m, _ in repr_in)

    key = jax.random.PRNGKey(0)
    kx, kw = jax.random.split(key)

    x = jax.random.normal(kx, (B, c_in, D, H, W), dtype=jnp.float32)

    # Deterministic parameters (synthetic, not a checkpoint load).
    bn_weight = 1.0 + 0.1 * jnp.arange(n_fields_in, dtype=jnp.float32)        # per-field scale
    conv_weight = 0.05 * jax.random.normal(kw, (c_out, c_in, size, size, size),
                                           dtype=jnp.float32)                 # dense conv kernel

    fn = jax.jit(joint_convolution, static_argnames=("repr_in",))
    out = jax.block_until_ready(fn(x, repr_in, bn_weight, conv_weight))

    expected = (B, c_out, D - size + 1, H - size + 1, W - size + 1)
    assert out.shape == expected, (out.shape, expected)
    assert bool(jnp.all(jnp.isfinite(out)))
    print("KERNEL_OK")
</pallas_src>

<mosaic_0001>
module attributes {stable_mosaic.version = 11 : i64} {
  func.func @_sumsq_rows_kernel(%arg0: i32, %arg1: memref<10x512xf32, #tpu.memory_space<vmem>>, %arg2: memref<10x1xf32, #tpu.memory_space<vmem>>) attributes {dimension_semantics = [#tpu.dimension_semantics<arbitrary>], iteration_bounds = array<i64: 1>, scalar_prefetch = 0 : i64, scratch_operands = 0 : i64, tpu.core_type = #tpu.core_type<tc>, window_params = [{transform_indices = @transform_0, window_bounds = array<i64: 10, 512>}, {pipeline_mode = #tpu.pipeline_mode<synchronous>, transform_indices = @transform_1, window_bounds = array<i64: 10, 1>}]} {
    %c0_i32 = arith.constant 0 : i32
    %0 = arith.cmpi eq, %arg0, %c0_i32 : i32
    %1 = arith.extui %0 : i1 to i32
    %c0_i32_0 = arith.constant 0 : i32
    %2 = arith.cmpi ne, %1, %c0_i32_0 : i32
    scf.if %2 {
      %cst_6 = arith.constant 0.000000e+00 : f32
      %10 = vector.broadcast %cst_6 : f32 to vector<10x1xf32>
      %c0_7 = arith.constant 0 : index
      %c0_8 = arith.constant 0 : index
      %11 = vector.load %arg2[%c0_7, %c0_8] : memref<10x1xf32, #tpu.memory_space<vmem>>, vector<10x1xf32>
      tpu.vector_store %arg2[%c0_7, %c0_8], %10 {strides = array<i32>} : memref<10x1xf32, #tpu.memory_space<vmem>>, vector<10x1xf32>,
    } else {
    }
    %c0 = arith.constant 0 : index
    %c0_1 = arith.constant 0 : index
    %3 = vector.load %arg1[%c0, %c0_1] : memref<10x512xf32, #tpu.memory_space<vmem>>, vector<10x512xf32>
    %c0_2 = arith.constant 0 : index
    %c0_3 = arith.constant 0 : index
    %4 = vector.load %arg2[%c0_2, %c0_3] : memref<10x1xf32, #tpu.memory_space<vmem>>, vector<10x1xf32>
    %5 = arith.mulf %3, %3 : vector<10x512xf32>
    %cst = arith.constant dense<0.000000e+00> : vector<10xf32>
    %6 = vector.multi_reduction <add>, %5, %cst [1] : vector<10x512xf32> to vector<10xf32>
    %7 = vector.shape_cast %6 : vector<10xf32> to vector<10x1xf32>
    %8 = arith.addf %4, %7 : vector<10x1xf32>
    %c0_4 = arith.constant 0 : index
    %c0_5 = arith.constant 0 : index
    %9 = vector.load %arg2[%c0_4, %c0_5] : memref<10x1xf32, #tpu.memory_space<vmem>>, vector<10x1xf32>
    tpu.vector_store %arg2[%c0_4, %c0_5], %8 {strides = array<i32>} : memref<10x1xf32, #tpu.memory_space<vmem>>, vector<10x1xf32>,
    return
  }
  func.func @transform_0(%arg0: i32) -> (i32, i32) {
    %c0_i32 = arith.constant 0 : i32
    %c0_i32_0 = arith.constant 0 : i32
    return %c0_i32, %arg0 : i32, i32
  }
  func.func @transform_1(%arg0: i32) -> (i32, i32) {
    %c0_i32 = arith.constant 0 : i32
    %c0_i32_0 = arith.constant 0 : i32
    %c0_i32_1 = arith.constant 0 : i32
    return %c0_i32, %c0_i32_0 : i32, i32
  }
}

module attributes {stable_mosaic.version = 11 : i64} {
  func.func @_conv_matmul_kernel(%arg0: i32, %arg1: i32, %arg2: memref<8x1024xbf16, #tpu.memory_space<vmem>>, %arg3: memref<512x128xbf16, #tpu.memory_space<vmem>>, %arg4: memref<8x128xf32, #tpu.memory_space<vmem>>) attributes {dimension_semantics = [#tpu.dimension_semantics<parallel>, #tpu.dimension_semantics<arbitrary>], iteration_bounds = array<i64: 1, 2>, scalar_prefetch = 0 : i64, scratch_operands = 0 : i64, tpu.core_type = #tpu.core_type<tc>, window_params = [{pipeline_mode = #tpu.pipeline_mode<synchronous>, transform_indices = @transform_0, window_bounds = array<i64: 8, 1024>}, {transform_indices = @transform_1, window_bounds = array<i64: 512, 128>}, {transform_indices = @transform_2, window_bounds = array<i64: 8, 128>}]} {
    %c0_i32 = arith.constant 0 : i32
    %0 = arith.cmpi eq, %arg1, %c0_i32 : i32
    %1 = arith.extui %0 : i1 to i32
    %c0_i32_0 = arith.constant 0 : i32
    %2 = arith.cmpi ne, %1, %c0_i32_0 : i32
    scf.if %2 {
      %cst_7 = arith.constant 0.000000e+00 : f32
      %12 = vector.broadcast %cst_7 : f32 to vector<8x128xf32>
      %c0_8 = arith.constant 0 : index
      %c0_9 = arith.constant 0 : index
      %13 = vector.load %arg4[%c0_8, %c0_9] : memref<8x128xf32, #tpu.memory_space<vmem>>, vector<8x128xf32>
      tpu.vector_store %arg4[%c0_8, %c0_9], %12 {strides = array<i32>} : memref<8x128xf32, #tpu.memory_space<vmem>>, vector<8x128xf32>,
    } else {
    }
    %c512_i32 = arith.constant 512 : i32
    %3 = arith.muli %arg1, %c512_i32 : i32
    %4 = tpu.assume_multiple %3, 512 : i32
    %c0 = arith.constant 0 : index
    %c0_1 = arith.constant 0 : index
    %5 = vector.load %arg4[%c0, %c0_1] : memref<8x128xf32, #tpu.memory_space<vmem>>, vector<8x128xf32>
    %c0_2 = arith.constant 0 : index
    %6 = arith.index_cast %4 : i32 to index
    %7 = vector.load %arg2[%c0_2, %6] : memref<8x1024xbf16, #tpu.memory_space<vmem>>, vector<8x512xbf16>
    %c0_3 = arith.constant 0 : index
    %c0_4 = arith.constant 0 : index
    %8 = vector.load %arg3[%c0_3, %c0_4] : memref<512x128xbf16, #tpu.memory_space<vmem>>, vector<512x128xbf16>
    %cst = arith.constant dense<0.000000e+00> : vector<8x128xf32>
    %9 = tpu.matmul %7, %8, %cst {dimension_numbers = #tpu.dot_dimension_numbers<[1], [0], [0], [1], [0, 0, 1, 1], [], []>} : vector<8x512xbf16>, vector<512x128xbf16>, vector<8x128xf32> -> vector<8x128xf32>
    %10 = arith.addf %5, %9 : vector<8x128xf32>
    %c0_5 = arith.constant 0 : index
    %c0_6 = arith.constant 0 : index
    %11 = vector.load %arg4[%c0_5, %c0_6] : memref<8x128xf32, #tpu.memory_space<vmem>>, vector<8x128xf32>
    tpu.vector_store %arg4[%c0_5, %c0_6], %10 {strides = array<i32>} : memref<8x128xf32, #tpu.memory_space<vmem>>, vector<8x128xf32>,
    return
  }
  func.func @transform_0(%arg0: i32, %arg1: i32) -> (i32, i32) {
    %c0_i32 = arith.constant 0 : i32
    %c0_i32_0 = arith.constant 0 : i32
    %c0_i32_1 = arith.constant 0 : i32
    return %c0_i32, %c0_i32_0 : i32, i32
  }
  func.func @transform_1(%arg0: i32, %arg1: i32) -> (i32, i32) {
    %c0_i32 = arith.constant 0 : i32
    return %arg1, %arg0 : i32, i32
  }
  func.func @transform_2(%arg0: i32, %arg1: i32) -> (i32, i32) {
    %c0_i32 = arith.constant 0 : i32
    %c0_i32_0 = arith.constant 0 : i32
    return %c0_i32, %arg0 : i32, i32
  }
}

</mosaic_0001>

<llo_original>
// kernel: joint_convolution.2
$region0: #{joint_convolution.2}
  #allocation0 [shape = 'u32[]', space=smem, size = 0x4, offset = 0x4, fixed_abs, tag = 'smem constant byte address 0x4 - core index']
  #allocation1 [shape = 'u32[144,128]{1,0:T(1,128)}', space=vmem, size = 0x12000, scoped, tag = 'internal scratch']
  %s0 = inlined_call_operand.vmem [shape: f32[10,512], index: 0, kind: input, shape index: {}]
  %s1 = inlined_call_operand.vmem [shape: f32[10,1], index: 1, kind: output, shape index: {}]
  %s2 = sld [smem:[#allocation0]]
  $region18: #{joint_convolution.2} parent=0
    _
  %s4 = ssub.s32 1, %s2
  %s5 = scalar_select 0, %s4, %s2
  // Predicated region
  $region2: #{joint_convolution.2} parent=0 // pred_check
    _
  $region3: #{joint_convolution.2} parent=0 // pred_check_branch
    %7 = sbr.rel (0) target = $region5
  $region4: #{joint_convolution.2} parent=0 // pred_region
    _
  $region5: #{joint_convolution.2} parent=0 // pred_fallthru
    _
  %p8 = scmp.eq.s32.totalorder 0, 0
  // Predicated region
  $region6: #{joint_convolution.2} parent=0 // pred_check
    %p9 = pneg %p8
  $region7: #{joint_convolution.2} parent=0 // pred_check_branch
    %11 = sbr.rel (%p9) target = $region9
  $region8: #{joint_convolution.2} parent=0 // pred_region
    %vm12 = vcmask 7168
    %13 = vst.msk [vmem:[%s1] sm:$0xff] %vm12, 0.0
    %vm14 = vcmask 1024
    %15 = vst.msk [vmem:[%s1 + $0x8] sm:$0x3] %vm14, 0.0
  $region9: #{joint_convolution.2} parent=0 // pred_fallthru
    _
  %v16 = vld [vmem:[%s0] sm:$0xff]
  %v17 = vld [vmem:[%s0 + $0x8] sm:$0xff]
  %v18 = vld [vmem:[%s0 + $0x10] sm:$0xff]
  %v19 = vld [vmem:[%s0 + $0x18] sm:$0xff]
  %v20 = vld [vmem:[%s0 + $0x20] sm:$0x3]
  %v21 = vld [vmem:[%s0 + $0x28] sm:$0x3]
  %v22 = vld [vmem:[%s0 + $0x30] sm:$0x3]
  %v23 = vld [vmem:[%s0 + $0x38] sm:$0x3]
  %v24 = vld [vmem:[%s1] sm:$0xff]
  %v25 = vld [vmem:[%s1 + $0x8] sm:$0x3]
  %v26 = vmul.f32 %v16, %v16
  %v27 = vmul.f32 %v17, %v17
  %v28 = vmul.f32 %v18, %v18
  %v29 = vmul.f32 %v19, %v19
  %v30 = vmul.f32 %v20, %v20
  %v31 = vmul.f32 %v21, %v21
  %v32 = vmul.f32 %v22, %v22
  %v33 = vmul.f32 %v23, %v23
  %v34 = vadd.f32 %v26, %v27
  %v35 = vadd.f32 %v34, %v28
  %v36 = vadd.f32 %v35, %v29
  %37 = vadd.xlane.f32.xlu0 %v36
  %v38 = vpop.xlane.xlu0 %37
  %vm39 = vcmask 1041408
  %v40 = vsel %vm39, %v30, 0.0
  %v41 = vsel %vm39, %v31, 0.0
  %v42 = vadd.f32 %v40, %v41
  %v43 = vsel %vm39, %v32, 0.0
  %v44 = vadd.f32 %v42, %v43
  %v45 = vsel %vm39, %v33, 0.0
  %v46 = vadd.f32 %v44, %v45
  %47 = vadd.xlane.f32.xlu0 %v46
  %v48 = vpop.xlane.xlu0 %47
  %v49 = vadd.f32 %v24, %v38
  %v50 = vadd.f32 %v25, %v48
  %vm51 = vcmask 7168
  %52 = vst.msk [vmem:[%s1] sm:$0xff] %vm51, %v49
  %vm53 = vcmask 1024
  %54 = vst.msk [vmem:[%s1 + $0x8] sm:$0x3] %vm53, %v50
  // Predicated region
  $region10: #{joint_convolution.2} parent=0 // pred_check
    _
  $region11: #{joint_convolution.2} parent=0 // pred_check_branch
    %56 = sbr.rel (0) target = $region13
  $region12: #{joint_convolution.2} parent=0 // pred_region
    _
  $region13: #{joint_convolution.2} parent=0 // pred_fallthru
    _
  // Predicated region
  $region14: #{joint_convolution.2} parent=0 // pred_check
    _
  $region15: #{joint_convolution.2} parent=0 // pred_check_branch
    %58 = sbr.rel (0) target = $region17
  $region16: #{joint_convolution.2} parent=0 // pred_region
    _
  $region17: #{joint_convolution.2} parent=0 // pred_fallthru
    _

// kernel: squeeze.4
$region0: #{squeeze.4}
  %s0 = inlined_call_operand.vmem [shape: f32[10], index: 0, kind: input, shape index: {}]
  %s1 = inlined_call_operand.vmem [shape: f32[2,5], index: 1, kind: output, shape index: {}]
  $region1: #{squeeze.4} parent=0
    #allocation0 [shape = 'u8[4096]{0}', space=vmem, size = 0x1000, scoped, tag = 'scoped mem for output reshape']
    #allocation1 [shape = 'u8[4096]{0}', space=vmem, size = 0x1000, scoped, tag = 'scoped mem for input reshape']
    %s3 = sshllo.u32 0, 1
    %v4 = vld [vmem:[%s0] sm:%s3]
    %5 = vst [vmem:[#allocation1] sm:%s3] %v4
    %v6 = vld [vmem:[#allocation1] sm:$0x1]
    %vm7 = vcmask 39936
    %8 = vst.msk [vmem:[#allocation0] sm:$0x1] %vm7, %v6
    %v9 = vld [vmem:[#allocation1] sm:$0x1]
    %10 = vrot.lane.b32.xlu0 %v9, 123
    %v11 = vpop.permute.xlu0 %10
    %vm12 = vcmask 39936
    %s13 = scalar_lea.vmem [#allocation0], 1
    %14 = vst.msk [vmem:[%s13] sm:$0x1] %vm12, %v11
    %s16 = sshllo.u32 0, 2
    %v18 = vld [vmem:[#allocation0] sm:%s16]
    %s19 = sshllo.u32 0, 2
    %20 = vst [vmem:[%s1] sm:%s19] %v18

// kernel: joint_convolution.3
$region0: #{joint_convolution.3}
  #allocation0 [shape = 'u32[]', space=smem, size = 0x4, offset = 0x4, fixed_abs, tag = 'smem constant byte address 0x4 - core index']
  #allocation1 [shape = 'u32[144,128]{1,0:T(1,128)}', space=vmem, size = 0x12000, scoped, tag = 'internal scratch']
  %s0 = inlined_call_operand.vmem [shape: bf16[8,1024], index: 0, kind: input, shape index: {}]
  %s1 = inlined_call_operand.vmem [shape: bf16[1024,128], index: 1, kind: input, shape index: {}]
  %s2 = inlined_call_operand.vmem [shape: f32[8,128], index: 2, kind: output, shape index: {}]
  %s3 = sld [smem:[#allocation0]]
  $region45: #{joint_convolution.3} parent=0
    _
  %s5 = ssub.s32 1, %s3
  %s6 = scalar_select 0, %s5, %s3
  loop: start=0, step=1, limit=4
  $region2: #{joint_convolution.3} parent=0 // loop_pre_header
    _
  $region3: #{joint_convolution.3} parent=0 // loop_header
    %s8 = sphi 0, %s12
    %p9 = scmp.ge.s32.totalorder %s8, 4
    %s15 = sphi 0, %s27
    %s16 = sphi 0, %s23
    %s17 = sphi 0, %s15
    %s18 = sphi 0, %s16
    %s19 = sphi 0, %s17
    %s20 = sphi 0, %s18
    %s28 = sphi 0, %s28
    %s30 = sphi 0, %s28
    %s31 = sphi 0, %s30
    %s45 = sphi 0, %s31
    %s53 = sphi 0, %s55
    %s56 = sphi 0, %s53
    %s57 = sphi 0, %s56
    %s73 = sphi 0, %s57
    %s79 = sphi 0, %s81
    %s82 = sphi 0, %s79
    %s83 = sphi 0, %s82
    %s99 = sphi 0, %s83
  $region4: #{joint_convolution.3} parent=0 // loop_header_branch
    %11 = sbr.rel (%p9) target = $region8
  $region5: #{joint_convolution.3} parent=0 // loop_body
    %s13 = ssub.s32 %s8, 1
    %s14 = ssub.s32 %s8, 2
    %s21 = sadd.s32 1, %s16
    %p22 = scmp.ge.s32.totalorder %s21, 2
    %s23 = scalar_select %p22, 0, %s21
    %s24 = sadd.s32 1, %s15
    %s25 = scalar_select %p22, %s24, %s15
    %p26 = scmp.ge.s32.totalorder %s25, 1
    %s27 = scalar_select %p26, 0, %s25
    %s29 = sadd.s32 %s28, 1
    %p32 = scmp.eq.s32.totalorder %s8, 1
    %p33 = scmp.ne.s32.totalorder %s28, %s30
    %p34 = scmp.eq.s32.totalorder %s8, 0
    %p35 = por %p33, %p34
    %p36 = scmp.ne.s32.totalorder %s28, %s30
    %p37 = scmp.eq.s32.totalorder %s13, 1
    %p38 = por %p36, %p37
    %p39 = scmp.ne.s32.totalorder %s30, %s31
    %p40 = scmp.eq.s32.totalorder %s13, 0
    %p41 = por %p39, %p40
    %p42 = scmp.ne.s32.totalorder %s30, %s31
    %p43 = scmp.eq.s32.totalorder %s14, 1
    %p44 = por %p42, %p43
    %p46 = scmp.ne.s32.totalorder %s31, %s45
    %p47 = scmp.eq.s32.totalorder %s14, 0
    %p48 = por %p46, %p47
    %s49 = ssub.s32 %s16, %s23
    %s50 = ssub.s32 %s15, %s27
    %s51 = sor.u32 %s49, %s50
    %p52 = scmp.eq.s32.totalorder %s51, 0
    %s54 = sadd.s32 %s53, 1
    %s55 = scalar_select %p52, %s53, %s54
    %p58 = pneg %p52
    %p59 = scmp.eq.s32.totalorder %s8, 1
    %p60 = por %p58, %p59
    %p61 = scmp.ne.s32.totalorder %s53, %s56
    %p62 = scmp.eq.s32.totalorder %s8, 0
    %p63 = por %p61, %p62
    %p64 = scmp.ne.s32.totalorder %s53, %s56
    %p65 = scmp.eq.s32.totalorder %s13, 1
    %p66 = por %p64, %p65
    %p67 = scmp.ne.s32.totalorder %s56, %s57
    %p68 = scmp.eq.s32.totalorder %s13, 0
    %p69 = por %p67, %p68
    %p70 = scmp.ne.s32.totalorder %s56, %s57
    %p71 = scmp.eq.s32.totalorder %s14, 1
    %p72 = por %p70, %p71
    %p74 = scmp.ne.s32.totalorder %s57, %s73
    %p75 = scmp.eq.s32.totalorder %s14, 0
    %p76 = por %p74, %p75
    %s77 = ssub.s32 %s15, %s27
    %p78 = scmp.eq.s32.totalorder %s77, 0
    %s80 = sadd.s32 %s79, 1
    %s81 = scalar_select %p78, %s79, %s80
    %p84 = pneg %p78
    %p85 = scmp.eq.s32.totalorder %s8, 1
    %p86 = por %p84, %p85
    %p87 = scmp.ne.s32.totalorder %s79, %s82
    %p88 = scmp.eq.s32.totalorder %s8, 0
    %p89 = por %p87, %p88
    %p90 = scmp.ne.s32.totalorder %s79, %s82
    %p91 = scmp.eq.s32.totalorder %s13, 1
    %p92 = por %p90, %p91
    %p93 = scmp.ne.s32.totalorder %s82, %s83
    %p94 = scmp.eq.s32.totalorder %s13, 0
    %p95 = por %p93, %p94
    %p96 = scmp.ne.s32.totalorder %s82, %s83
    %p97 = scmp.eq.s32.totalorder %s14, 1
    %p98 = por %p96, %p97
    %p100 = scmp.ne.s32.totalorder %s83, %s99
    %p101 = scmp.eq.s32.totalorder %s14, 0
    %p102 = por %p100, %p101
    %p103 = scmp.le.s32.totalorder 1, %s8
    %p104 = scmp.lt.s32.totalorder %s8, 3
    %p105 = pnand %p103, %p104
    %p106 = pneg %p105
    // Predicated region
    $region9: #{joint_convolution.3} parent=5 // pred_check
      _
    $region10: #{joint_convolution.3} parent=5 // pred_check_branch
      %108 = sbr.rel (%p105) target = $region12
    $region11: #{joint_convolution.3} parent=5 // pred_region
      %s109 = ssub.s32 %s8, 1
      // Predicated region
      $region13: #{joint_convolution.3} parent=11 // pred_check
        %p110 = pneg %p41
      $region14: #{joint_convolution.3} parent=11 // pred_check_branch
        %112 = sbr.rel (%p110) target = $region16
      $region15: #{joint_convolution.3} parent=11 // pred_region
        _
      $region16: #{joint_convolution.3} parent=11 // pred_fallthru
        _
    $region12: #{joint_convolution.3} parent=5 // pred_fallthru
      _
    %p113 = scmp.lt.s32.totalorder %s8, 2
    // Predicated region
    $region17: #{joint_convolution.3} parent=5 // pred_check
      %p114 = pneg %p113
    $region18: #{joint_convolution.3} parent=5 // pred_check_branch
      %116 = sbr.rel (%p114) target = $region20
    $region19: #{joint_convolution.3} parent=5 // pred_region
      // Predicated region
      $region21: #{joint_convolution.3} parent=19 // pred_check
        %p117 = pneg %p63
      $region22: #{joint_convolution.3} parent=19 // pred_check_branch
        %119 = sbr.rel (%p117) target = $region24
      $region23: #{joint_convolution.3} parent=19 // pred_region
        %s120 = smul.u32 64, %s16
        %p121 = scmp.lt.s32.totalorder %s120, 127
        %s122 = scalar_select %p121, %s120, 127
        %p123 = scmp.lt.s32.totalorder %s15, 0
        %s124 = scalar_select %p123, %s15, 0
        %s125 = sadd.s32 %s124, %s122
        %s126 = smul.addr %s125, 4
        %s127 = scalar_lea.vmem %s1, %s126
        %s128 = smul.u32 64, %s16
      $region24: #{joint_convolution.3} parent=19 // pred_fallthru
        _
    $region20: #{joint_convolution.3} parent=5 // pred_fallthru
      _
    %p129 = scmp.le.s32.totalorder 1, %s8
    %p130 = scmp.lt.s32.totalorder %s8, 3
    %p131 = pnand %p129, %p130
    %p132 = pneg %p131
    // Predicated region
    $region25: #{joint_convolution.3} parent=5 // pred_check
      _
    $region26: #{joint_convolution.3} parent=5 // pred_check_branch
      %134 = sbr.rel (%p131) target = $region28
    $region27: #{joint_convolution.3} parent=5 // pred_region
      %s135 = ssub.s32 %s8, 1
      %p136 = pneg %p41
      %p137 = pneg %p38
      %s138 = smul.u32 64, %s18
      %p139 = scmp.lt.s32.totalorder %s138, 127
      %s140 = scalar_select %p139, %s138, 127
      %p141 = scmp.lt.s32.totalorder %s17, 0
      %s142 = scalar_select %p141, %s17, 0
      %s143 = sadd.s32 %s142, %s140
      %s144 = smul.addr %s143, 4
      %s145 = scalar_lea.vmem %s1, %s144
      %p146 = pneg %p69
      %p147 = pneg %p66
      %p148 = pneg %p95
      %p149 = pneg %p92
      %p150 = scmp.lt.s32.totalorder %s17, 0
      %s151 = scalar_select %p150, %s17, 0
      %s152 = smul.addr %s151, 8
      %s153 = scalar_lea.vmem %s2, %s152
      %s154 = smul.u32 64, %s18
      %p155 = scmp.lt.s32.totalorder %s154, 127
      %s156 = scalar_select %p155, %s154, 127
      %p157 = scmp.lt.s32.totalorder %s17, 0
      %s158 = scalar_select %p157, %s17, 0
      %s159 = sadd.s32 %s158, %s156
      %s160 = smul.addr %s159, 4
      %s161 = scalar_lea.vmem %s1, %s160
      %s162 = smul.u32 64, %s18
      %p163 = scmp.lt.s32.totalorder %s17, 0
      %s164 = scalar_select %p163, %s17, 0
      %s165 = smul.addr %s164, 8
      %s166 = scalar_lea.vmem %s2, %s165
      %p168 = scmp.eq.s32.totalorder %s18, 0
      // Predicated region
      $region29: #{joint_convolution.3} parent=27 // pred_check
        %p169 = pneg %p168
      $region30: #{joint_convolution.3} parent=27 // pred_check_branch
        %171 = sbr.rel (%p169) target = $region32
      $region31: #{joint_convolution.3} parent=27 // pred_region
        %172 = vst [vmem:[%s166] sm:$0xff] 0.0
      $region32: #{joint_convolution.3} parent=27 // pred_fallthru
        _
      %s173 = smul.u32 %s18, 512
      %v174 = vld [vmem:[%s166] sm:$0xff]
      %s175 = sshra.s32 %s173, 7
      %s176 = sand.u32 %s173, 127
      %s177 = smul.addr %s175, 4
      %s178 = scalar_lea.vmem %s0, %s177
      %v179 = vld [vmem:[%s178] sm:$0xff]
      %v180 = vld [vmem:[%s178 + $0x8] sm:$0xff]
      %v181 = vld [vmem:[%s161] sm:$0xf]
      %v182 = vld [vmem:[%s161 + $0x4] sm:$0xf]
      %v183 = vld [vmem:[%s161 + $0x8] sm:$0xf]
      %v184 = vld [vmem:[%s161 + $0xc] sm:$0xf]
      %v185 = vld [vmem:[%s161 + $0x10] sm:$0xf]
      %v186 = vld [vmem:[%s161 + $0x14] sm:$0xf]
      %v187 = vld [vmem:[%s161 + $0x18] sm:$0xf]
      %v188 = vld [vmem:[%s161 + $0x1c] sm:$0xf]
      %v189 = vld [vmem:[%s161 + $0x20] sm:$0xf]
      %v190 = vld [vmem:[%s161 + $0x24] sm:$0xf]
      %v191 = vld [vmem:[%s161 + $0x28] sm:$0xf]
      %v192 = vld [vmem:[%s161 + $0x2c] sm:$0xf]
      %v193 = vld [vmem:[%s161 + $0x30] sm:$0xf]
      %v194 = vld [vmem:[%s161 + $0x34] sm:$0xf]
      %v195 = vld [vmem:[%s161 + $0x38] sm:$0xf]
      %v196 = vld [vmem:[%s161 + $0x3c] sm:$0xf]
      %v197 = vld [vmem:[%s161 + $0x40] sm:$0xf]
      %v198 = vld [vmem:[%s161 + $0x44] sm:$0xf]
      %v199 = vld [vmem:[%s161 + $0x48] sm:$0xf]
      %v200 = vld [vmem:[%s161 + $0x4c] sm:$0xf]
      %v201 = vld [vmem:[%s161 + $0x50] sm:$0xf]
      %v202 = vld [vmem:[%s161 + $0x54] sm:$0xf]
      %v203 = vld [vmem:[%s161 + $0x58] sm:$0xf]
      %v204 = vld [vmem:[%s161 + $0x5c] sm:$0xf]
      %v205 = vld [vmem:[%s161 + $0x60] sm:$0xf]
      %v206 = vld [vmem:[%s161 + $0x64] sm:$0xf]
      %v207 = vld [vmem:[%s161 + $0x68] sm:$0xf]
      %v208 = vld [vmem:[%s161 + $0x6c] sm:$0xf]
      %v209 = vld [vmem:[%s161 + $0x70] sm:$0xf]
      %v210 = vld [vmem:[%s161 + $0x74] sm:$0xf]
      %v211 = vld [vmem:[%s161 + $0x78] sm:$0xf]
      %v212 = vld [vmem:[%s161 + $0x7c] sm:$0xf]
      %v213 = vld [vmem:[%s161 + $0x80] sm:$0xf]
      %v214 = vld [vmem:[%s161 + $0x84] sm:$0xf]
      %v215 = vld [vmem:[%s161 + $0x88] sm:$0xf]
      %v216 = vld [vmem:[%s161 + $0x8c] sm:$0xf]
      %v217 = vld [vmem:[%s161 + $0x90] sm:$0xf]
      %v218 = vld [vmem:[%s161 + $0x94] sm:$0xf]
      %v219 = vld [vmem:[%s161 + $0x98] sm:$0xf]
      %v220 = vld [vmem:[%s161 + $0x9c] sm:$0xf]
      %v221 = vld [vmem:[%s161 + $0xa0] sm:$0xf]
      %v222 = vld [vmem:[%s161 + $0xa4] sm:$0xf]
      %v223 = vld [vmem:[%s161 + $0xa8] sm:$0xf]
      %v224 = vld [vmem:[%s161 + $0xac] sm:$0xf]
      %v225 = vld [vmem:[%s161 + $0xb0] sm:$0xf]
      %v226 = vld [vmem:[%s161 + $0xb4] sm:$0xf]
      %v227 = vld [vmem:[%s161 + $0xb8] sm:$0xf]
      %v228 = vld [vmem:[%s161 + $0xbc] sm:$0xf]
      %v229 = vld [vmem:[%s161 + $0xc0] sm:$0xf]
      %v230 = vld [vmem:[%s161 + $0xc4] sm:$0xf]
      %v231 = vld [vmem:[%s161 + $0xc8] sm:$0xf]
      %v232 = vld [vmem:[%s161 + $0xcc] sm:$0xf]
      %v233 = vld [vmem:[%s161 + $0xd0] sm:$0xf]
      %v234 = vld [vmem:[%s161 + $0xd4] sm:$0xf]
      %v235 = vld [vmem:[%s161 + $0xd8] sm:$0xf]
      %v236 = vld [vmem:[%s161 + $0xdc] sm:$0xf]
      %v237 = vld [vmem:[%s161 + $0xe0] sm:$0xf]
      %v238 = vld [vmem:[%s161 + $0xe4] sm:$0xf]
      %v239 = vld [vmem:[%s161 + $0xe8] sm:$0xf]
      %v240 = vld [vmem:[%s161 + $0xec] sm:$0xf]
      %v241 = vld [vmem:[%s161 + $0xf0] sm:$0xf]
      %v242 = vld [vmem:[%s161 + $0xf4] sm:$0xf]
      %v243 = vld [vmem:[%s161 + $0xf8] sm:$0xf]
      %v244 = vld [vmem:[%s161 + $0xfc] sm:$0xf]
      %v247 = vunpack.c.l.b16 %v179
      %v248 = vunpack.c.h.b16 %v179
      %v249 = vunpack.c.l.b16 %v180
      %v250 = vunpack.c.h.b16 %v180
      %v251 = vpack.c.b16 %v247, %v247
      %v252 = vpack.c.b16 %v248, %v248
      %v253 = vpack.c.b16 %v249, %v249
      %v254 = vpack.c.b16 %v250, %v250
      %v323 = vunpack.c.l.b16 %v181
      %v324 = vunpack.c.l.b16 %v182
      %v325 = vunpack.c.l.b16 %v183
      %v326 = vunpack.c.l.b16 %v184
      %v327 = vunpack.c.l.b16 %v185
      %v328 = vunpack.c.l.b16 %v186
      %v329 = vunpack.c.l.b16 %v187
      %v330 = vunpack.c.l.b16 %v188
      %v331 = vunpack.c.l.b16 %v189
      %v332 = vunpack.c.l.b16 %v190
      %v333 = vunpack.c.l.b16 %v191
      %v334 = vunpack.c.l.b16 %v192
      %v335 = vunpack.c.l.b16 %v193
      %v336 = vunpack.c.l.b16 %v194
      %v337 = vunpack.c.l.b16 %v195
      %v338 = vunpack.c.l.b16 %v196
      %v339 = vunpack.c.l.b16 %v197
      %v340 = vunpack.c.l.b16 %v198
      %v341 = vunpack.c.l.b16 %v199
      %v342 = vunpack.c.l.b16 %v200
      %v343 = vunpack.c.l.b16 %v201
      %v344 = vunpack.c.l.b16 %v202
      %v345 = vunpack.c.l.b16 %v203
      %v346 = vunpack.c.l.b16 %v204
      %v347 = vunpack.c.l.b16 %v205
      %v348 = vunpack.c.l.b16 %v206
      %v349 = vunpack.c.l.b16 %v207
      %v350 = vunpack.c.l.b16 %v208
      %v351 = vunpack.c.l.b16 %v209
      %v352 = vunpack.c.l.b16 %v210
      %v353 = vunpack.c.l.b16 %v211
      %v354 = vunpack.c.l.b16 %v212
      %v355 = vunpack.c.l.b16 %v213
      %v356 = vunpack.c.l.b16 %v214
      %v357 = vunpack.c.l.b16 %v215
      %v358 = vunpack.c.l.b16 %v216
      %v359 = vunpack.c.l.b16 %v217
      %v360 = vunpack.c.l.b16 %v218
      %v361 = vunpack.c.l.b16 %v219
      %v362 = vunpack.c.l.b16 %v220
      %v363 = vunpack.c.l.b16 %v221
      %v364 = vunpack.c.l.b16 %v222
      %v365 = vunpack.c.l.b16 %v223
      %v366 = vunpack.c.l.b16 %v224
      %v367 = vunpack.c.l.b16 %v225
      %v368 = vunpack.c.l.b16 %v226
      %v369 = vunpack.c.l.b16 %v227
      %v370 = vunpack.c.l.b16 %v228
      %v371 = vunpack.c.l.b16 %v229
      %v372 = vunpack.c.l.b16 %v230
      %v373 = vunpack.c.l.b16 %v231
      %v374 = vunpack.c.l.b16 %v232
      %v375 = vunpack.c.l.b16 %v233
      %v376 = vunpack.c.l.b16 %v234
      %v377 = vunpack.c.l.b16 %v235
      %v378 = vunpack.c.l.b16 %v236
      %v379 = vunpack.c.l.b16 %v237
      %v380 = vunpack.c.l.b16 %v238
      %v381 = vunpack.c.l.b16 %v239
      %v382 = vunpack.c.l.b16 %v240
      %v383 = vunpack.c.l.b16 %v241
      %v384 = vunpack.c.l.b16 %v242
      %v385 = vunpack.c.l.b16 %v243
      %v386 = vunpack.c.l.b16 %v244
      %v387 = vpack.c.b16 %v324, %v323
      %v388 = vpack.c.b16 %v326, %v325
      %v389 = vpack.c.b16 %v328, %v327
      %v390 = vpack.c.b16 %v330, %v329
      %v391 = vpack.c.b16 %v332, %v331
      %v392 = vpack.c.b16 %v334, %v333
      %v393 = vpack.c.b16 %v336, %v335
      %v394 = vpack.c.b16 %v338, %v337
      %v395 = vpack.c.b16 %v340, %v339
      %v396 = vpack.c.b16 %v342, %v341
      %v397 = vpack.c.b16 %v344, %v343
      %v398 = vpack.c.b16 %v346, %v345
      %v399 = vpack.c.b16 %v348, %v347
      %v400 = vpack.c.b16 %v350, %v349
      %v401 = vpack.c.b16 %v352, %v351
      %v402 = vpack.c.b16 %v354, %v353
      %v403 = vpack.c.b16 %v356, %v355
      %v404 = vpack.c.b16 %v358, %v357
      %v405 = vpack.c.b16 %v360, %v359
      %v406 = vpack.c.b16 %v362, %v361
      %v407 = vpack.c.b16 %v364, %v363
      %v408 = vpack.c.b16 %v366, %v365
      %v409 = vpack.c.b16 %v368, %v367
      %v410 = vpack.c.b16 %v370, %v369
      %v411 = vpack.c.b16 %v372, %v371
      %v412 = vpack.c.b16 %v374, %v373
      %v413 = vpack.c.b16 %v376, %v375
      %v414 = vpack.c.b16 %v378, %v377
      %v415 = vpack.c.b16 %v380, %v379
      %v416 = vpack.c.b16 %v382, %v381
      %v417 = vpack.c.b16 %v384, %v383
      %v418 = vpack.c.b16 %v386, %v385
      %451 = vmatprep.subr.bf16.mxu0 0
      %452 = vmatpush1.bf16.msra.mxu0 %v387
      %453 = vmatprep.subr.bf16.mxu0 0
      %454 = vmatpush1.bf16.msra.mxu0 %v388
      %455 = vmatprep.subr.bf16.mxu0 0
      %456 = vmatpush1.bf16.msra.mxu0 %v389
      %457 = vmatprep.subr.bf16.mxu0 0
      %458 = vmatpush1.bf16.msra.mxu0 %v390
      %459 = vmatprep.subr.bf16.mxu0 0
      %460 = vmatpush1.bf16.msra.mxu0 %v391
      %461 = vmatprep.subr.bf16.mxu0 0
      %462 = vmatpush1.bf16.msra.mxu0 %v392
      %463 = vmatprep.subr.bf16.mxu0 0
      %464 = vmatpush1.bf16.msra.mxu0 %v393
      %465 = vmatprep.subr.bf16.mxu0 0
      %466 = vmatpush1.bf16.msra.mxu0 %v394
      %467 = vmatprep.subr.bf16.mxu0 0
      %468 = vmatpush1.bf16.msra.mxu0 %v395
      %469 = vmatprep.subr.bf16.mxu0 0
      %470 = vmatpush1.bf16.msra.mxu0 %v396
      %471 = vmatprep.subr.bf16.mxu0 0
      %472 = vmatpush1.bf16.msra.mxu0 %v397
      %473 = vmatprep.subr.bf16.mxu0 0
      %474 = vmatpush1.bf16.msra.mxu0 %v398
      %475 = vmatprep.subr.bf16.mxu0 0
      %476 = vmatpush1.bf16.msra.mxu0 %v399
      %477 = vmatprep.subr.bf16.mxu0 0
      %478 = vmatpush1.bf16.msra.mxu0 %v400
      %479 = vmatprep.subr.bf16.mxu0 0
      %480 = vmatpush1.bf16.msra.mxu0 %v401
      %481 = vmatprep.subr.bf16.mxu0 0
      %482 = vmatpush1.bf16.msra.mxu0 %v402
      %483 = vmatprep.mubr.bf16.mxu0 %v252
      %484 = vmatmul.mubr.bf16.gmra.mrb[0].mxu0 %v251
      %v485 = vpop.f32.mrb[0].mxu0
      %v486 = vadd.f32 0.0, %v485
      %v487 = vpop.f32.mrb[0].mxu0
      %v488 = vpop.f32.mrb[0].mxu0
      %v489 = vpop.f32.mrb[0].mxu0
      %490 = vdwg.mxu0
      %491 = vmatprep.subr.bf16.mxu0 0
      %492 = vmatpush1.bf16.msra.mxu0 %v403
      %493 = vmatprep.subr.bf16.mxu0 0
      %494 = vmatpush1.bf16.msra.mxu0 %v404
      %495 = vmatprep.subr.bf16.mxu0 0
      %496 = vmatpush1.bf16.msra.mxu0 %v405
      %497 = vmatprep.subr.bf16.mxu0 0
      %498 = vmatpush1.bf16.msra.mxu0 %v406
      %499 = vmatprep.subr.bf16.mxu0 0
      %500 = vmatpush1.bf16.msra.mxu0 %v407
      %501 = vmatprep.subr.bf16.mxu0 0
      %502 = vmatpush1.bf16.msra.mxu0 %v408
      %503 = vmatprep.subr.bf16.mxu0 0
      %504 = vmatpush1.bf16.msra.mxu0 %v409
      %505 = vmatprep.subr.bf16.mxu0 0
      %506 = vmatpush1.bf16.msra.mxu0 %v410
      %507 = vmatprep.subr.bf16.mxu0 0
      %508 = vmatpush1.bf16.msra.mxu0 %v411
      %509 = vmatprep.subr.bf16.mxu0 0
      %510 = vmatpush1.bf16.msra.mxu0 %v412
      %511 = vmatprep.subr.bf16.mxu0 0
      %512 = vmatpush1.bf16.msra.mxu0 %v413
      %513 = vmatprep.subr.bf16.mxu0 0
      %514 = vmatpush1.bf16.msra.mxu0 %v414
      %515 = vmatprep.subr.bf16.mxu0 0
      %516 = vmatpush1.bf16.msra.mxu0 %v415
      %517 = vmatprep.subr.bf16.mxu0 0
      %518 = vmatpush1.bf16.msra.mxu0 %v416
      %519 = vmatprep.subr.bf16.mxu0 0
      %520 = vmatpush1.bf16.msra.mxu0 %v417
      %521 = vmatprep.subr.bf16.mxu0 0
      %522 = vmatpush1.bf16.msra.mxu0 %v418
      %523 = vmatprep.mubr.bf16.mxu0 %v254
      %524 = vmatmul.mubr.bf16.gmra.mrb[0].mxu0 %v253
      %v525 = vpop.f32.mrb[0].mxu0
      %v526 = vadd.f32 %v486, %v525
      %v527 = vpop.f32.mrb[0].mxu0
      %v528 = vpop.f32.mrb[0].mxu0
      %v529 = vpop.f32.mrb[0].mxu0
      %530 = vdwg.mxu0
      %v531 = vadd.f32 %v174, %v526
      %532 = vst [vmem:[%s166] sm:$0xff] %v531
      %p533 = scmp.lt.s32.totalorder %s17, 0
      %s534 = scalar_select %p533, %s17, 0
      %s535 = smul.addr %s534, 8
      %s536 = scalar_lea.vmem %s2, %s535
      // Predicated region
      $region33: #{joint_convolution.3} parent=27 // pred_check
        %p537 = pneg %p92
      $region34: #{joint_convolution.3} parent=27 // pred_check_branch
        %539 = sbr.rel (%p537) target = $region36
      $region35: #{joint_convolution.3} parent=27 // pred_region
        _
      $region36: #{joint_convolution.3} parent=27 // pred_fallthru
        _
      // Predicated region
      $region37: #{joint_convolution.3} parent=27 // pred_check
        %p540 = pneg %p92
      $region38: #{joint_convolution.3} parent=27 // pred_check_branch
        %542 = sbr.rel (%p540) target = $region40
      $region39: #{joint_convolution.3} parent=27 // pred_region
        %p543 = scmp.lt.s32.totalorder %s17, 0
        %s544 = scalar_select %p543, %s17, 0
        %s545 = smul.addr %s544, 8
        %s546 = scalar_lea.vmem %s2, %s545
      $region40: #{joint_convolution.3} parent=27 // pred_fallthru
        _
    $region28: #{joint_convolution.3} parent=5 // pred_fallthru
      _
    %p547 = scmp.le.s32.totalorder 2, %s8
    // Predicated region
    $region41: #{joint_convolution.3} parent=5 // pred_check
      %p548 = pneg %p547
    $region42: #{joint_convolution.3} parent=5 // pred_check_branch
      %550 = sbr.rel (%p548) target = $region44
    $region43: #{joint_convolution.3} parent=5 // pred_region
      %s551 = ssub.s32 %s8, 2
    $region44: #{joint_convolution.3} parent=5 // pred_fallthru
      _
  $region6: #{joint_convolution.3} parent=0 // loop_footer
    %s12 = sadd.s32 1, %s8
  $region7: #{joint_convolution.3} parent=0 // loop_footer_branch
    %7 = sbr.rel target = $region3
  $region8: #{joint_convolution.3} parent=0 // loop_exit
    _

</llo_original>
